<compile_context>
chip_gen: v7x
topology: tpu7x:2x2x1
jax: 0.10.0
libtpu: 0.0.40
codegen_flags: <defaults>
</compile_context>

<pallas_src>
import math

import jax
import jax.numpy as jnp
from jax.experimental import pallas as pl
from jax.experimental.pallas import tpu as pltpu


# ---------------------------------------------------------------------------
# Kernels: trivial VPU elementwise multiply / multiply-add (memory-bound).
# Broadcasting handles both the 4D ((1,C,hw) * (1,C,1)) and the 2D
# ((rt,W) * (1,W)) block shapes.
# ---------------------------------------------------------------------------

def _scale_kernel(x_ref, g_ref, o_ref):
    o_ref[...] = x_ref[...] * g_ref[...]


def _scale_bias_kernel(x_ref, g_ref, b_ref, o_ref):
    o_ref[...] = x_ref[...] * g_ref[...] + b_ref[...]


# ---------------------------------------------------------------------------
# Tile-size helpers (byte-budgeted; keep blocks (8,128)-legal).
# ---------------------------------------------------------------------------

_TARGET_BLOCK_BYTES = 1 << 20  # ~1 MiB per input block


def _choose_hw_tile(hw, c, itemsize, target_bytes=_TARGET_BLOCK_BYTES):
    """Lane-axis tile for the (1, C, hw_tile) 4D block."""
    if hw % 128 != 0:
        # Full spatial extent (== full array dim, so block-shape rule holds).
        return hw
    t = (target_bytes // max(1, c * itemsize)) // 128 * 128
    t = max(128, t)
    return int(min(t, hw))


def _choose_row_tile(rows, width, itemsize, target_bytes=_TARGET_BLOCK_BYTES):
    """Sublane-axis tile for the (row_tile, width) 2D block."""
    if rows < 8:
        return rows  # == full dim, legal
    t = (target_bytes // max(1, width * itemsize)) // 8 * 8
    t = max(8, t)
    return int(min(t, (rows // 8) * 8))


def _lane_fold_factor(rows, c, max_lanes=1024):
    """Fold k row-groups into lanes so (k*c) % 128 == 0 (zero-copy reshape)."""
    if c % 128 == 0:
        return 1
    need = 128 // math.gcd(c, 128)
    if rows % need != 0:
        return 1
    k = need
    while k * 2 * c <= max_lanes and rows % (k * 2) == 0:
        k *= 2
    return k


# ---------------------------------------------------------------------------
# pallas_call wrappers
# ---------------------------------------------------------------------------

def _scale_nchw(x3, gamma3, beta3, hw_tile):
    """x3: (N, C, HW); gamma3/beta3: (1, C, 1) (beta3 may be None)."""
    N, C, HW = x3.shape
    grid = (N, pl.cdiv(HW, hw_tile))

    x_spec = pl.BlockSpec((1, C, hw_tile), lambda n, h: (n, 0, h))
    p_spec = pl.BlockSpec((1, C, 1), lambda n, h: (0, 0, 0))  # resident params

    if beta3 is None:
        kernel, in_specs, args = _scale_kernel, [x_spec, p_spec], (x3, gamma3)
    else:
        kernel = _scale_bias_kernel
        in_specs = [x_spec, p_spec, p_spec]
        args = (x3, gamma3, beta3)

    return pl.pallas_call(
        kernel,
        out_shape=jax.ShapeDtypeStruct((N, C, HW), x3.dtype),
        grid_spec=pltpu.PrefetchScalarGridSpec(
            num_scalar_prefetch=0,
            grid=grid,
            in_specs=in_specs,
            out_specs=x_spec,
        ),
        compiler_params=pltpu.CompilerParams(
            dimension_semantics=("parallel", "parallel"),
        ),
    )(*args)


def _scale_rows(x2, gamma2, beta2, row_tile):
    """x2: (rows, W); gamma2/beta2: (1, W) (beta2 may be None)."""
    rows, W = x2.shape
    grid = (pl.cdiv(rows, row_tile),)

    x_spec = pl.BlockSpec((row_tile, W), lambda i: (i, 0))
    p_spec = pl.BlockSpec((1, W), lambda i: (0, 0))  # resident params

    if beta2 is None:
        kernel, in_specs, args = _scale_kernel, [x_spec, p_spec], (x2, gamma2)
    else:
        kernel = _scale_bias_kernel
        in_specs = [x_spec, p_spec, p_spec]
        args = (x2, gamma2, beta2)

    return pl.pallas_call(
        kernel,
        out_shape=jax.ShapeDtypeStruct((rows, W), x2.dtype),
        grid_spec=pltpu.PrefetchScalarGridSpec(
            num_scalar_prefetch=0,
            grid=grid,
            in_specs=in_specs,
            out_specs=x_spec,
        ),
        compiler_params=pltpu.CompilerParams(
            dimension_semantics=("parallel",),
        ),
    )(*args)


def scale_forward(x, gamma, beta=None):
    """Pallas implementation of Scale.forward.

    x: (N, C, H, W) [NCHW, as PyTorch] or (N, C).
    gamma: (C,), beta: (C,) or None.
    """
    gamma = gamma.astype(x.dtype)
    if beta is not None:
        beta = beta.astype(x.dtype)
    itemsize = x.dtype.itemsize

    if x.ndim == 4:
        N, C, H, W = x.shape
        HW = H * W
        x3 = x.reshape(N, C, HW)  # zero-copy view, stays in NCHW order
        hw_tile = _choose_hw_tile(HW, C, itemsize)
        g3 = gamma.reshape(1, C, 1)
        b3 = beta.reshape(1, C, 1) if beta is not None else None
        out3 = _scale_nchw(x3, g3, b3, hw_tile)
        return out3.reshape(N, C, H, W)

    elif x.ndim == 2:
        rows, C = x.shape
        k = _lane_fold_factor(rows, C)
        if k > 1:
            # Zero-copy fold of k rows into the lane axis; tile params k times
            # (tiny, done once in the wrapper).
            x2 = x.reshape(rows // k, k * C)
            g2 = jnp.tile(gamma, k).reshape(1, k * C)
            b2 = jnp.tile(beta, k).reshape(1, k * C) if beta is not None else None
        else:
            x2 = x
            g2 = gamma.reshape(1, C)
            b2 = beta.reshape(1, C) if beta is not None else None
        r, w = x2.shape
        row_tile = _choose_row_tile(r, w, itemsize)
        out2 = _scale_rows(x2, g2, b2, row_tile)
        return out2.reshape(rows, C)

    else:
        raise AssertionError("Scale only supports 2D or 4D inputs")


if __name__ == "__main__":
    key = jax.random.PRNGKey(0)
    k1, k2, k3, k4, k5 = jax.random.split(key, 5)

    # 4D case: NCHW input, batch=2, channels=4, spatial=16
    N, C, H, W = 2, 4, 16, 16
    x4 = jax.random.normal(k1, (N, C, H, W), dtype=jnp.float32)
    # reset_parameters would set gamma=1, beta=0; use non-trivial deterministic
    # values to actually exercise the kernel.
    gamma = jax.random.normal(k2, (C,), dtype=jnp.float32)
    beta = jax.random.normal(k3, (C,), dtype=jnp.float32)

    # bias=False path
    out4 = jax.block_until_ready(scale_forward(x4, gamma))
    ref4 = x4 * gamma.reshape(1, -1, 1, 1)
    assert jnp.allclose(out4, ref4, atol=1e-6), "4D no-bias mismatch"

    # bias=True path
    out4b = jax.block_until_ready(scale_forward(x4, gamma, beta))
    ref4b = ref4 + beta.reshape(1, -1, 1, 1)
    assert jnp.allclose(out4b, ref4b, atol=1e-6), "4D bias mismatch"

    # 2D case: (batch, features) = (8, 32)
    x2 = jax.random.normal(k4, (8, 32), dtype=jnp.float32)
    gamma2 = jax.random.normal(k5, (32,), dtype=jnp.float32)
    out2 = jax.block_until_ready(scale_forward(x2, gamma2))
    ref2 = x2 * gamma2.reshape(1, -1)
    assert jnp.allclose(out2, ref2, atol=1e-6), "2D mismatch"

    # 2D bias path as well
    beta2 = jax.random.normal(k3, (32,), dtype=jnp.float32)
    out2b = jax.block_until_ready(scale_forward(x2, gamma2, beta2))
    ref2b = ref2 + beta2.reshape(1, -1)
    assert jnp.allclose(out2b, ref2b, atol=1e-6), "2D bias mismatch"

    print("KERNEL_OK")
</pallas_src>

<mosaic_0001>
module attributes {stable_mosaic.version = 11 : i64} {
  func.func @_scale_kernel(%arg0: i32, %arg1: i32, %arg2: memref<1x4x256xf32, #tpu.memory_space<vmem>>, %arg3: memref<1x4x1xf32, #tpu.memory_space<vmem>>, %arg4: memref<1x4x256xf32, #tpu.memory_space<vmem>>) attributes {dimension_semantics = [#tpu.dimension_semantics<parallel>, #tpu.dimension_semantics<parallel>], iteration_bounds = array<i64: 2, 1>, scalar_prefetch = 0 : i64, scratch_operands = 0 : i64, tpu.core_type = #tpu.core_type<tc>, window_params = [{transform_indices = @transform_0, window_bounds = array<i64: 1, 4, 256>}, {pipeline_mode = #tpu.pipeline_mode<synchronous>, transform_indices = @transform_1, window_bounds = array<i64: 1, 4, 1>}, {transform_indices = @transform_2, window_bounds = array<i64: 1, 4, 256>}]} {
    %c0 = arith.constant 0 : index
    %c0_0 = arith.constant 0 : index
    %c0_1 = arith.constant 0 : index
    %0 = vector.load %arg2[%c0, %c0_0, %c0_1] : memref<1x4x256xf32, #tpu.memory_space<vmem>>, vector<1x4x256xf32>
    %c0_2 = arith.constant 0 : index
    %c0_3 = arith.constant 0 : index
    %c0_4 = arith.constant 0 : index
    %1 = vector.load %arg3[%c0_2, %c0_3, %c0_4] : memref<1x4x1xf32, #tpu.memory_space<vmem>>, vector<1x4x1xf32>
    %2 = vector.broadcast %1 : vector<1x4x1xf32> to vector<1x4x256xf32>
    %3 = arith.mulf %0, %2 : vector<1x4x256xf32>
    %c0_5 = arith.constant 0 : index
    %c0_6 = arith.constant 0 : index
    %c0_7 = arith.constant 0 : index
    %4 = vector.load %arg4[%c0_5, %c0_6, %c0_7] : memref<1x4x256xf32, #tpu.memory_space<vmem>>, vector<1x4x256xf32>
    tpu.vector_store %arg4[%c0_5, %c0_6, %c0_7], %3 {strides = array<i32>} : memref<1x4x256xf32, #tpu.memory_space<vmem>>, vector<1x4x256xf32>,
    return
  }
  func.func @transform_0(%arg0: i32, %arg1: i32) -> (i32, i32, i32) {
    %c0_i32 = arith.constant 0 : i32
    %c0_i32_0 = arith.constant 0 : i32
    return %arg0, %c0_i32, %arg1 : i32, i32, i32
  }
  func.func @transform_1(%arg0: i32, %arg1: i32) -> (i32, i32, i32) {
    %c0_i32 = arith.constant 0 : i32
    %c0_i32_0 = arith.constant 0 : i32
    %c0_i32_1 = arith.constant 0 : i32
    %c0_i32_2 = arith.constant 0 : i32
    return %c0_i32, %c0_i32_0, %c0_i32_1 : i32, i32, i32
  }
  func.func @transform_2(%arg0: i32, %arg1: i32) -> (i32, i32, i32) {
    %c0_i32 = arith.constant 0 : i32
    %c0_i32_0 = arith.constant 0 : i32
    return %arg0, %c0_i32, %arg1 : i32, i32, i32
  }
}

</mosaic_0001>

<llo_original>
// kernel: tpu_custom_call.1
$region0: #{tpu_custom_call.1}
  #allocation0 [shape = 'u32[]', space=smem, size = 0x4, offset = 0x4, fixed_abs, tag = 'smem constant byte address 0x4 - core index']
  #allocation1 [shape = 'u32[144,128]{1,0:T(1,128)}', space=vmem, size = 0x12000, scoped, tag = 'internal scratch']
  %s0 = inlined_call_operand.hbm [shape: f32[2,4,256], index: 0, kind: input, shape index: {}]
  %s1 = inlined_call_operand.vmem [shape: f32[1,4,1], index: 1, kind: input, shape index: {}]
  %s2 = inlined_call_operand.hbm [shape: f32[2,4,256], index: 2, kind: output, shape index: {}]
  %s3 = sld [smem:[#allocation0]]
  $region45: #{tpu_custom_call.1} parent=0
    _
  %s5 = ssub.s32 1, %s3
  %s6 = scalar_select 0, %s5, %s3
  $region1: #{tpu_custom_call.1} parent=0
    #allocation2 [shape = 'u8[8192]{0}', space=vmem, size = 0x2000, scoped, tag = 'input window, operand 0']
    #allocation3 [shape = 's32[2]{0}', space=sflag, size = 0x8, scoped, tag = 'scoped memory for tpu_custom_call.1']
    #allocation4 [shape = 's32[2]{0}', space=sflag, size = 0x8, scoped, tag = 'scoped memory for tpu_custom_call.1']
    #allocation5 [shape = 'u8[8192]{0}', space=vmem, size = 0x2000, scoped, tag = 'output window, operand 0']
    %7 = vsyncpa [#allocation3], 0
    %s8 = scalar_lea.sflag [#allocation3], 1
    %9 = vsyncpa %s8, 0
    %10 = vsyncpa [#allocation4], 0
    %s11 = scalar_lea.sflag [#allocation4], 1
    %12 = vsyncpa %s11, 0
    loop: start=0, step=1, limit=4
    $region2: #{tpu_custom_call.1} parent=1 // loop_pre_header
      _
    $region3: #{tpu_custom_call.1} parent=1 // loop_header
      %s14 = sphi 0, %s18
      %p15 = scmp.ge.s32.totalorder %s14, 4
      %s21 = sphi 0, %s33
      %s22 = sphi 0, %s29
      %s23 = sphi 0, %s21
      %s24 = sphi 0, %s22
      %s25 = sphi 0, %s23
      %s26 = sphi 0, %s24
      %s38 = sphi 0, %s40
      %s41 = sphi 0, %s38
      %s42 = sphi 0, %s41
      %s58 = sphi 0, %s42
      %s62 = sphi 0, %s62
      %s64 = sphi 0, %s62
      %s65 = sphi 0, %s64
      %s79 = sphi 0, %s65
      %s87 = sphi 0, %s89
      %s90 = sphi 0, %s87
      %s91 = sphi 0, %s90
      %s107 = sphi 0, %s91
    $region4: #{tpu_custom_call.1} parent=1 // loop_header_branch
      %17 = sbr.rel (%p15) target = $region8
    $region5: #{tpu_custom_call.1} parent=1 // loop_body
      %s19 = ssub.s32 %s14, 1
      %s20 = ssub.s32 %s14, 2
      %s27 = sadd.s32 1, %s22
      %p28 = scmp.ge.s32.totalorder %s27, 1
      %s29 = scalar_select %p28, 0, %s27
      %s30 = sadd.s32 1, %s21
      %s31 = scalar_select %p28, %s30, %s21
      %p32 = scmp.ge.s32.totalorder %s31, 2
      %s33 = scalar_select %p32, 0, %s31
      %s34 = ssub.s32 %s21, %s33
      %s35 = ssub.s32 %s22, %s29
      %s36 = sor.u32 %s34, %s35
      %p37 = scmp.eq.s32.totalorder %s36, 0
      %s39 = sadd.s32 %s38, 1
      %s40 = scalar_select %p37, %s38, %s39
      %p43 = pneg %p37
      %p44 = scmp.eq.s32.totalorder %s14, 1
      %p45 = por %p43, %p44
      %p46 = scmp.ne.s32.totalorder %s38, %s41
      %p47 = scmp.eq.s32.totalorder %s14, 0
      %p48 = por %p46, %p47
      %p49 = scmp.ne.s32.totalorder %s38, %s41
      %p50 = scmp.eq.s32.totalorder %s19, 1
      %p51 = por %p49, %p50
      %p52 = scmp.ne.s32.totalorder %s41, %s42
      %p53 = scmp.eq.s32.totalorder %s19, 0
      %p54 = por %p52, %p53
      %p55 = scmp.ne.s32.totalorder %s41, %s42
      %p56 = scmp.eq.s32.totalorder %s20, 1
      %p57 = por %p55, %p56
      %p59 = scmp.ne.s32.totalorder %s42, %s58
      %p60 = scmp.eq.s32.totalorder %s20, 0
      %p61 = por %p59, %p60
      %s63 = sadd.s32 %s62, 1
      %p66 = scmp.eq.s32.totalorder %s14, 1
      %p67 = scmp.ne.s32.totalorder %s62, %s64
      %p68 = scmp.eq.s32.totalorder %s14, 0
      %p69 = por %p67, %p68
      %p70 = scmp.ne.s32.totalorder %s62, %s64
      %p71 = scmp.eq.s32.totalorder %s19, 1
      %p72 = por %p70, %p71
      %p73 = scmp.ne.s32.totalorder %s64, %s65
      %p74 = scmp.eq.s32.totalorder %s19, 0
      %p75 = por %p73, %p74
      %p76 = scmp.ne.s32.totalorder %s64, %s65
      %p77 = scmp.eq.s32.totalorder %s20, 1
      %p78 = por %p76, %p77
      %p80 = scmp.ne.s32.totalorder %s65, %s79
      %p81 = scmp.eq.s32.totalorder %s20, 0
      %p82 = por %p80, %p81
      %s83 = ssub.s32 %s21, %s33
      %s84 = ssub.s32 %s22, %s29
      %s85 = sor.u32 %s83, %s84
      %p86 = scmp.eq.s32.totalorder %s85, 0
      %s88 = sadd.s32 %s87, 1
      %s89 = scalar_select %p86, %s87, %s88
      %p92 = pneg %p86
      %p93 = scmp.eq.s32.totalorder %s14, 1
      %p94 = por %p92, %p93
      %p95 = scmp.ne.s32.totalorder %s87, %s90
      %p96 = scmp.eq.s32.totalorder %s14, 0
      %p97 = por %p95, %p96
      %p98 = scmp.ne.s32.totalorder %s87, %s90
      %p99 = scmp.eq.s32.totalorder %s19, 1
      %p100 = por %p98, %p99
      %p101 = scmp.ne.s32.totalorder %s90, %s91
      %p102 = scmp.eq.s32.totalorder %s19, 0
      %p103 = por %p101, %p102
      %p104 = scmp.ne.s32.totalorder %s90, %s91
      %p105 = scmp.eq.s32.totalorder %s20, 1
      %p106 = por %p104, %p105
      %p108 = scmp.ne.s32.totalorder %s91, %s107
      %p109 = scmp.eq.s32.totalorder %s20, 0
      %p110 = por %p108, %p109
      %p111 = scmp.le.s32.totalorder 1, %s14
      %p112 = scmp.lt.s32.totalorder %s14, 3
      %p113 = pnand %p111, %p112
      %p114 = pneg %p113
      // Predicated region
      $region9: #{tpu_custom_call.1} parent=5 // pred_check
        _
      $region10: #{tpu_custom_call.1} parent=5 // pred_check_branch
        %116 = sbr.rel (%p113) target = $region12
      $region11: #{tpu_custom_call.1} parent=5 // pred_region
        %s117 = ssub.s32 %s14, 1
        // Predicated region
        $region13: #{tpu_custom_call.1} parent=11 // pred_check
          %p118 = pneg %p75
        $region14: #{tpu_custom_call.1} parent=11 // pred_check_branch
          %120 = sbr.rel (%p118) target = $region16
        $region15: #{tpu_custom_call.1} parent=11 // pred_region
          _
        $region16: #{tpu_custom_call.1} parent=11 // pred_fallthru
          _
      $region12: #{tpu_custom_call.1} parent=5 // pred_fallthru
        _
      %p121 = scmp.lt.s32.totalorder %s14, 2
      // Predicated region
      $region17: #{tpu_custom_call.1} parent=5 // pred_check
        %p122 = pneg %p121
      $region18: #{tpu_custom_call.1} parent=5 // pred_check_branch
        %124 = sbr.rel (%p122) target = $region20
      $region19: #{tpu_custom_call.1} parent=5 // pred_region
        // Predicated region
        $region21: #{tpu_custom_call.1} parent=19 // pred_check
          %p125 = pneg %p48
        $region22: #{tpu_custom_call.1} parent=19 // pred_check_branch
          %127 = sbr.rel (%p125) target = $region24
        $region23: #{tpu_custom_call.1} parent=19 // pred_region
          %s128 = sand.u32 %s38, 1
          %s129 = scalar_lea.sflag [#allocation3], %s128
          %s130 = sand.u32 %s38, 1
          %s131 = smul.addr %s130, 8
          %s132 = scalar_lea.vmem [#allocation2], %s131
          %s133 = smul.u32 2, %s22
          %s135 = ssub.s32 128, 128
          %136 = vsyncadd %s129, %s135
          %s137 = smul.addr %s21, 2
          %s138 = sadd.s32 %s133, %s137
          %s139 = smul.addr %s138, 64
          %s140 = scalar_lea.hbm %s0, %s139
          %s142 = sshll.u32 %s132, 4
          %s143 = int_to_ptr.vmem [resolvable:$true] %s142
          %145 = dma.hbm_to_vmem [thread:$0]  %s140, 128, %s143, %s129
        $region24: #{tpu_custom_call.1} parent=19 // pred_fallthru
          _
      $region20: #{tpu_custom_call.1} parent=5 // pred_fallthru
        _
      %p146 = scmp.le.s32.totalorder 1, %s14
      %p147 = scmp.lt.s32.totalorder %s14, 3
      %p148 = pnand %p146, %p147
      %p149 = pneg %p148
      // Predicated region
      $region25: #{tpu_custom_call.1} parent=5 // pred_check
        _
      $region26: #{tpu_custom_call.1} parent=5 // pred_check_branch
        %151 = sbr.rel (%p148) target = $region28
      $region27: #{tpu_custom_call.1} parent=5 // pred_region
        %s152 = ssub.s32 %s14, 1
        %s153 = sand.u32 %s41, 1
        %s154 = scalar_lea.sflag [#allocation3], %s153
        %s155 = sand.u32 %s41, 1
        %s156 = smul.addr %s155, 8
        %s157 = scalar_lea.vmem [#allocation2], %s156
        // Predicated region
        $region29: #{tpu_custom_call.1} parent=27 // pred_check
          %p158 = pneg %p54
        $region30: #{tpu_custom_call.1} parent=27 // pred_check_branch
          %160 = sbr.rel (%p158) target = $region32
        $region31: #{tpu_custom_call.1} parent=27 // pred_region
          %161 = dma.done %s154, 128
        $region32: #{tpu_custom_call.1} parent=27 // pred_fallthru
          _
        %s162 = sand.u32 %s41, 1
        %s163 = scalar_lea.sflag [#allocation3], %s162
        %s164 = sand.u32 %s41, 1
        %s165 = smul.addr %s164, 8
        %s166 = scalar_lea.vmem [#allocation2], %s165
        %p167 = pneg %p54
        %p168 = pneg %p51
        %p169 = pneg %p75
        %p170 = pneg %p72
        %p171 = pneg %p103
        %p172 = pneg %p100
        %s173 = sand.u32 %s90, 1
        %s174 = scalar_lea.sflag [#allocation4], %s173
        %s175 = sand.u32 %s90, 1
        %s176 = smul.addr %s175, 8
        %s177 = scalar_lea.vmem [#allocation5], %s176
        %s178 = smul.u32 2, %s24
        %s179 = smul.u32 2, %s24
        %v180 = vld [vmem:[%s157] sm:$0xff]
        %v181 = vld [vmem:[%s1] sm:$0xf]
        %183 = vset.pattern.permute.xlu0 0
        %184 = vperm.xlu0 %183, %v181
        %v185 = vpop.permute.xlu0 %184
        %v187 = vunpack.c.l.s4 839922192
        %v188 = vunpack.c.0.s8 %v187
        %v189 = vlaneseq
        %v190 = vshrl.u32 %v189, 7
        %v191 = vsub.s32 %v188, %v190
        %v192 = vrot.slane %v185, %v191
        %v194 = vmul.f32 %v180, %v192
        %195 = vst [vmem:[%s177] sm:$0xff] %v194
        %s196 = sand.u32 %s90, 1
        %s197 = scalar_lea.sflag [#allocation4], %s196
        %s198 = sand.u32 %s90, 1
        %s199 = smul.addr %s198, 8
        %s200 = scalar_lea.vmem [#allocation5], %s199
        // Predicated region
        $region33: #{tpu_custom_call.1} parent=27 // pred_check
          %p201 = pneg %p100
        $region34: #{tpu_custom_call.1} parent=27 // pred_check_branch
          %203 = sbr.rel (%p201) target = $region36
        $region35: #{tpu_custom_call.1} parent=27 // pred_region
          %s204 = smul.u32 2, %s24
          %s206 = ssub.s32 128, 128
          %207 = vsyncadd %s197, %s206
          %s208 = smul.addr %s23, 2
          %s209 = sadd.s32 %s204, %s208
          %s210 = smul.addr %s209, 64
          %s211 = scalar_lea.hbm %s2, %s210
          %s213 = sshll.u32 %s200, 4
          %s214 = int_to_ptr.vmem [resolvable:$true] %s213
          %216 = dma.vmem_to_hbm [thread:$0]  %s214, 128, %s211, %s197
        $region36: #{tpu_custom_call.1} parent=27 // pred_fallthru
          _
      $region28: #{tpu_custom_call.1} parent=5 // pred_fallthru
        _
      %p217 = scmp.le.s32.totalorder 2, %s14
      // Predicated region
      $region37: #{tpu_custom_call.1} parent=5 // pred_check
        %p218 = pneg %p217
      $region38: #{tpu_custom_call.1} parent=5 // pred_check_branch
        %220 = sbr.rel (%p218) target = $region40
      $region39: #{tpu_custom_call.1} parent=5 // pred_region
        %s221 = ssub.s32 %s14, 2
        // Predicated region
        $region41: #{tpu_custom_call.1} parent=39 // pred_check
          %p222 = pneg %p106
        $region42: #{tpu_custom_call.1} parent=39 // pred_check_branch
          %224 = sbr.rel (%p222) target = $region44
        $region43: #{tpu_custom_call.1} parent=39 // pred_region
          %s225 = sand.u32 %s91, 1
          %s226 = scalar_lea.sflag [#allocation4], %s225
          %s227 = sand.u32 %s91, 1
          %s228 = smul.addr %s227, 8
          %s229 = scalar_lea.vmem [#allocation5], %s228
          %230 = dma.done %s226, 128
        $region44: #{tpu_custom_call.1} parent=39 // pred_fallthru
          _
      $region40: #{tpu_custom_call.1} parent=5 // pred_fallthru
        _
    $region6: #{tpu_custom_call.1} parent=1 // loop_footer
      %s18 = sadd.s32 1, %s14
    $region7: #{tpu_custom_call.1} parent=1 // loop_footer_branch
      %13 = sbr.rel target = $region3
    $region8: #{tpu_custom_call.1} parent=1 // loop_exit
      _
    %231 = vsyncpa [#allocation3], 1
    %s232 = scalar_lea.sflag [#allocation3], 1
    %233 = vsyncpa %s232, 1
    %234 = vsyncpa [#allocation4], 1
    %s235 = scalar_lea.sflag [#allocation4], 1
    %236 = vsyncpa %s235, 1

</llo_original>
